<compile_context>
chip_gen: v6e
topology: v6e:2x2x1
jax: 0.10.0
libtpu: 0.0.40
codegen_flags: <defaults>
</compile_context>

<pallas_src>
import jax
import jax.numpy as jnp
from jax.experimental import pallas as pl
from jax.experimental.pallas import tpu as pltpu

LANE = 128


def _round_up(x, m):
    return ((x + m - 1) // m) * m


def critic_kernel(s_ref, w1_ref, b1_ref, w2_ref, b2_ref, w3_ref, b3_ref, out_ref):
    # bf16 only for MXU operands; epilogue stays f32.
    x = s_ref[...].astype(jnp.bfloat16)

    # Layer 1: (B, S) @ (S, H1p) on the MXU, f32 accumulation.
    h1 = jnp.dot(x, w1_ref[...], preferred_element_type=jnp.float32)
    h1 = jnp.maximum(h1 + b1_ref[...], 0.0)

    # Layer 2: (B, H1p) @ (H1p, H2p).
    h2 = jnp.dot(h1.astype(jnp.bfloat16), w2_ref[...],
                 preferred_element_type=jnp.float32)
    h2 = jnp.maximum(h2 + b2_ref[...], 0.0)

    # Layer 3: N=1 matmul replaced by VPU multiply + lane (XLU) reduction.
    w3_row = w3_ref[...].astype(jnp.float32)           # (1, H2p)
    v = jnp.sum(h2 * w3_row, axis=-1, keepdims=True)   # (B, 1)
    v = v + b3_ref[0]                                   # scalar bias from SMEM
    out_ref[...] = v.astype(out_ref.dtype)


def critic_forward(s, packed_params):
    """Forward pass of the critic on padded / bf16-packed parameters."""
    w1, b1, w2, b2, w3, b3 = packed_params
    B = s.shape[0]

    vmem = pl.BlockSpec(memory_space=pltpu.MemorySpace.VMEM)
    smem = pl.BlockSpec(memory_space=pltpu.MemorySpace.SMEM)

    return pl.pallas_call(
        critic_kernel,
        out_shape=jax.ShapeDtypeStruct((B, 1), s.dtype),
        in_specs=[vmem,   # s
                  vmem,   # w1
                  vmem,   # b1
                  vmem,   # w2
                  vmem,   # b2
                  vmem,   # w3 row
                  smem],  # b3 scalar
        out_specs=vmem,
    )(s, w1, b1, w2, b2, w3, b3)


def init_critic_params(key, state_size, hidden1=400, hidden2=300,
                       dtype=jnp.float32):
    """PyTorch default nn.Linear init: U(-1/sqrt(fan_in), 1/sqrt(fan_in))
    for both weights and biases. Weights stored transposed: (fan_in, fan_out)."""
    ks = jax.random.split(key, 6)

    def lin(kw, kb, fan_in, fan_out):
        bound = fan_in ** -0.5
        w = jax.random.uniform(kw, (fan_in, fan_out), dtype, -bound, bound)
        b = jax.random.uniform(kb, (1, fan_out), dtype, -bound, bound)
        return w, b

    w1, b1 = lin(ks[0], ks[1], state_size, hidden1)
    w2, b2 = lin(ks[2], ks[3], hidden1, hidden2)
    w3, b3 = lin(ks[4], ks[5], hidden2, 1)
    return w1, b1, w2, b2, w3, b3


def pack_critic_params(params, weight_dtype=jnp.bfloat16):
    """Zero-pad hidden dims to 128-lane multiples and cast weights to bf16.
    Biases stay f32 (f32 VPU epilogue). Done once, outside the kernel."""
    w1, b1, w2, b2, w3, b3 = params
    S, H1 = w1.shape
    H2 = w2.shape[1]
    H1p = _round_up(H1, LANE)
    H2p = _round_up(H2, LANE)

    w1p = jnp.zeros((S, H1p), weight_dtype).at[:, :H1].set(w1.astype(weight_dtype))
    b1p = jnp.zeros((1, H1p), jnp.float32).at[:, :H1].set(b1.astype(jnp.float32))
    w2p = jnp.zeros((H1p, H2p), weight_dtype).at[:H1, :H2].set(w2.astype(weight_dtype))
    b2p = jnp.zeros((1, H2p), jnp.float32).at[:, :H2].set(b2.astype(jnp.float32))
    # Final layer as a (1, H2p) row for the VPU reduce; output bias as SMEM scalar.
    w3p = jnp.zeros((1, H2p), weight_dtype).at[:, :H2].set(
        w3.reshape(1, H2).astype(weight_dtype))
    b3p = b3.reshape((1,)).astype(jnp.float32)
    return w1p, b1p, w2p, b2p, w3p, b3p


if __name__ == "__main__":
    key = jax.random.PRNGKey(0)
    k_x, k_p = jax.random.split(key)

    batch = 8
    state_size = 32
    hidden1 = 400
    hidden2 = 300

    s = jax.random.normal(k_x, (batch, state_size), dtype=jnp.float32)
    params = init_critic_params(k_p, state_size, hidden1, hidden2)
    packed = pack_critic_params(params)

    out = critic_forward(s, packed)
    out = jax.block_until_ready(out)

    # Reference in plain f32 JAX (kernel weights are bf16 -> loose tolerance).
    w1, b1, w2, b2, w3, b3 = params
    ref = jnp.maximum(s @ w1 + b1, 0.0)
    ref = jnp.maximum(ref @ w2 + b2, 0.0)
    ref = ref @ w3 + b3

    assert out.shape == (batch, 1)
    assert jnp.allclose(out, ref, atol=3e-2, rtol=3e-2), (out, ref)

    print("KERNEL_OK")
</pallas_src>

<mosaic_0001>
module attributes {stable_mosaic.version = 11 : i64} {
  func.func @critic_kernel(%arg0: memref<8x32xf32, #tpu.memory_space<vmem>>, %arg1: memref<32x512xbf16, #tpu.memory_space<vmem>>, %arg2: memref<1x512xf32, #tpu.memory_space<vmem>>, %arg3: memref<512x384xbf16, #tpu.memory_space<vmem>>, %arg4: memref<1x384xf32, #tpu.memory_space<vmem>>, %arg5: memref<1x384xbf16, #tpu.memory_space<vmem>>, %arg6: memref<1xf32, #tpu.memory_space<smem>>, %arg7: memref<8x1xf32, #tpu.memory_space<vmem>>) attributes {dimension_semantics = [], scalar_prefetch = 0 : i64, scratch_operands = 0 : i64, tpu.core_type = #tpu.core_type<tc>} {
    %c0 = arith.constant 0 : index
    %c0_0 = arith.constant 0 : index
    %0 = vector.load %arg0[%c0, %c0_0] : memref<8x32xf32, #tpu.memory_space<vmem>>, vector<8x32xf32>
    %1 = arith.truncf %0 : vector<8x32xf32> to vector<8x32xbf16>
    %c0_1 = arith.constant 0 : index
    %c0_2 = arith.constant 0 : index
    %2 = vector.load %arg1[%c0_1, %c0_2] : memref<32x512xbf16, #tpu.memory_space<vmem>>, vector<32x512xbf16>
    %cst = arith.constant dense<0.000000e+00> : vector<8x512xf32>
    %3 = tpu.matmul %1, %2, %cst {dimension_numbers = #tpu.dot_dimension_numbers<[1], [0], [0], [1], [0, 0, 1, 1], [], []>} : vector<8x32xbf16>, vector<32x512xbf16>, vector<8x512xf32> -> vector<8x512xf32>
    %c0_3 = arith.constant 0 : index
    %c0_4 = arith.constant 0 : index
    %4 = vector.load %arg2[%c0_3, %c0_4] : memref<1x512xf32, #tpu.memory_space<vmem>>, vector<1x512xf32>
    %5 = vector.broadcast %4 : vector<1x512xf32> to vector<8x512xf32>
    %6 = arith.addf %3, %5 : vector<8x512xf32>
    %cst_5 = arith.constant 0.000000e+00 : f32
    %7 = vector.broadcast %cst_5 : f32 to vector<8x512xf32>
    %8 = arith.maximumf %6, %7 : vector<8x512xf32>
    %9 = arith.truncf %8 : vector<8x512xf32> to vector<8x512xbf16>
    %c0_6 = arith.constant 0 : index
    %c0_7 = arith.constant 0 : index
    %10 = vector.load %arg3[%c0_6, %c0_7] : memref<512x384xbf16, #tpu.memory_space<vmem>>, vector<512x384xbf16>
    %cst_8 = arith.constant dense<0.000000e+00> : vector<8x384xf32>
    %11 = tpu.matmul %9, %10, %cst_8 {dimension_numbers = #tpu.dot_dimension_numbers<[1], [0], [0], [1], [0, 0, 1, 1], [], []>} : vector<8x512xbf16>, vector<512x384xbf16>, vector<8x384xf32> -> vector<8x384xf32>
    %c0_9 = arith.constant 0 : index
    %c0_10 = arith.constant 0 : index
    %12 = vector.load %arg4[%c0_9, %c0_10] : memref<1x384xf32, #tpu.memory_space<vmem>>, vector<1x384xf32>
    %13 = vector.broadcast %12 : vector<1x384xf32> to vector<8x384xf32>
    %14 = arith.addf %11, %13 : vector<8x384xf32>
    %cst_11 = arith.constant 0.000000e+00 : f32
    %15 = vector.broadcast %cst_11 : f32 to vector<8x384xf32>
    %16 = arith.maximumf %14, %15 : vector<8x384xf32>
    %c0_12 = arith.constant 0 : index
    %c0_13 = arith.constant 0 : index
    %17 = vector.load %arg5[%c0_12, %c0_13] : memref<1x384xbf16, #tpu.memory_space<vmem>>, vector<1x384xbf16>
    %18 = arith.extf %17 : vector<1x384xbf16> to vector<1x384xf32>
    %19 = vector.broadcast %18 : vector<1x384xf32> to vector<8x384xf32>
    %20 = arith.mulf %16, %19 : vector<8x384xf32>
    %cst_14 = arith.constant dense<0.000000e+00> : vector<8xf32>
    %21 = vector.multi_reduction <add>, %20, %cst_14 [1] : vector<8x384xf32> to vector<8xf32>
    %22 = vector.shape_cast %21 : vector<8xf32> to vector<8x1xf32>
    %c0_15 = arith.constant 0 : index
    %23 = memref.load %arg6[%c0_15] : memref<1xf32, #tpu.memory_space<smem>>
    %24 = vector.broadcast %23 : f32 to vector<8x1xf32>
    %25 = arith.addf %22, %24 : vector<8x1xf32>
    %c0_16 = arith.constant 0 : index
    %c0_17 = arith.constant 0 : index
    %26 = vector.load %arg7[%c0_16, %c0_17] : memref<8x1xf32, #tpu.memory_space<vmem>>, vector<8x1xf32>
    tpu.vector_store %arg7[%c0_16, %c0_17], %25 {strides = array<i32>} : memref<8x1xf32, #tpu.memory_space<vmem>>, vector<8x1xf32>,
    return
  }
}

</mosaic_0001>

<llo_original>
// kernel: tpu_custom_call.1
$region0: #{tpu_custom_call.1}
  #allocation0 [shape = 'u32[]', space=smem, size = 0x4, offset = 0x4, fixed_abs, tag = 'smem constant byte address 0x4 - core index']
  #allocation1 [shape = 'u32[144,128]{1,0:T(1,128)}', space=vmem, size = 0x12000, scoped, tag = 'internal scratch']
  #allocation2 [shape = 'f32[1]{0:T(128)S(6)}', space=smem, size = 0x200, scoped, tag = 'scoped memory for tpu_custom_call.1']
  %s0 = inlined_call_operand.hbm [shape: f32[8,32], index: 0, kind: input, shape index: {}]
  %s1 = inlined_call_operand.hbm [shape: bf16[32,512], index: 1, kind: input, shape index: {}]
  %s2 = inlined_call_operand.vmem [shape: f32[1,512], index: 2, kind: input, shape index: {}]
  %s3 = inlined_call_operand.hbm [shape: bf16[512,384], index: 3, kind: input, shape index: {}]
  %s4 = inlined_call_operand.vmem [shape: f32[1,384], index: 4, kind: input, shape index: {}]
  %s5 = inlined_call_operand.vmem [shape: bf16[1,384], index: 5, kind: input, shape index: {}]
  %s6 = inlined_call_operand.<no memory space> [shape: f32[1], index: 6, kind: input, shape index: {}]
  %s7 = inlined_call_operand.vmem [shape: f32[8,1], index: 7, kind: output, shape index: {}]
  %s8 = sld [smem:[#allocation0]]
  $region50: #{tpu_custom_call.1} parent=0
    _
  %s10 = ssub.s32 1, %s8
  %s11 = scalar_select 0, %s10, %s8
  %12 = sst [smem:[#allocation2]] %s6
  $region1: #{tpu_custom_call.1} parent=0
    #allocation3 [shape = 'u8[4096]{0}', space=vmem, size = 0x1000, scoped, tag = 'input window, operand 0, single buffered']
    #allocation4 [shape = 's32[1]{0}', space=sflag, size = 0x4, scoped, tag = 'scoped memory for tpu_custom_call.1']
    #allocation5 [shape = 'u8[32768]{0}', space=vmem, size = 0x8000, scoped, tag = 'input window, operand 1, single buffered']
    #allocation6 [shape = 's32[1]{0}', space=sflag, size = 0x4, scoped, tag = 'scoped memory for tpu_custom_call.1']
    #allocation7 [shape = 'u8[393216]{0}', space=vmem, size = 0x60000, scoped, tag = 'input window, operand 3, single buffered']
    %13 = vsyncpa [#allocation4], 0
    %14 = vsyncpa [#allocation6], 0
    // Predicated region
    $region2: #{tpu_custom_call.1} parent=1 // pred_check
      _
    $region3: #{tpu_custom_call.1} parent=1 // pred_check_branch
      %16 = sbr.rel (0) target = $region5
    $region4: #{tpu_custom_call.1} parent=1 // pred_region
      %s18 = ssub.s32 128, 128
      %19 = vsyncadd [#allocation4], %s18
      %s21 = sshll.u32 [#allocation3], 4
      %s22 = int_to_ptr.vmem [resolvable:$true] %s21
      %24 = dma.hbm_to_vmem [thread:$0]  %s0, 128, %s22, [#allocation4]
    $region5: #{tpu_custom_call.1} parent=1 // pred_fallthru
      _
    // Predicated region
    $region6: #{tpu_custom_call.1} parent=1 // pred_check
      _
    $region7: #{tpu_custom_call.1} parent=1 // pred_check_branch
      %26 = sbr.rel (0) target = $region9
    $region8: #{tpu_custom_call.1} parent=1 // pred_region
      %s28 = ssub.s32 1024, 1024
      %29 = vsyncadd [#allocation6], %s28
      %s30 = sshll.u32 [#allocation5], 4
      %s31 = int_to_ptr.vmem [resolvable:$true] %s30
      %36 = dma.hbm_to_vmem [thread:$0]  %s1, 1024, %s31, [#allocation6], 256, 256, 16
    $region9: #{tpu_custom_call.1} parent=1 // pred_fallthru
      _
    // Predicated region
    $region10: #{tpu_custom_call.1} parent=1 // pred_check
      _
    $region11: #{tpu_custom_call.1} parent=1 // pred_check_branch
      %38 = sbr.rel (0) target = $region13
    $region12: #{tpu_custom_call.1} parent=1 // pred_region
      _
    $region13: #{tpu_custom_call.1} parent=1 // pred_fallthru
      _
    // Predicated region
    $region14: #{tpu_custom_call.1} parent=1 // pred_check
      _
    $region15: #{tpu_custom_call.1} parent=1 // pred_check_branch
      %40 = sbr.rel (0) target = $region17
    $region16: #{tpu_custom_call.1} parent=1 // pred_region
      %s42 = ssub.s32 12288, 12288
      %43 = vsyncadd [#allocation6], %s42
      %s44 = sshll.u32 [#allocation7], 4
      %s45 = int_to_ptr.vmem [resolvable:$true] %s44
      %50 = dma.hbm_to_vmem [thread:$0]  %s3, 12288, %s45, [#allocation6], 192, 192, 12
    $region17: #{tpu_custom_call.1} parent=1 // pred_fallthru
      _
    // Predicated region
    $region18: #{tpu_custom_call.1} parent=1 // pred_check
      _
    $region19: #{tpu_custom_call.1} parent=1 // pred_check_branch
      %52 = sbr.rel (0) target = $region21
    $region20: #{tpu_custom_call.1} parent=1 // pred_region
      _
    $region21: #{tpu_custom_call.1} parent=1 // pred_fallthru
      _
    // Predicated region
    $region22: #{tpu_custom_call.1} parent=1 // pred_check
      _
    $region23: #{tpu_custom_call.1} parent=1 // pred_check_branch
      %54 = sbr.rel (0) target = $region25
    $region24: #{tpu_custom_call.1} parent=1 // pred_region
      _
    $region25: #{tpu_custom_call.1} parent=1 // pred_fallthru
      _
    // Predicated region
    $region26: #{tpu_custom_call.1} parent=1 // pred_check
      _
    $region27: #{tpu_custom_call.1} parent=1 // pred_check_branch
      %56 = sbr.rel (0) target = $region29
    $region28: #{tpu_custom_call.1} parent=1 // pred_region
      _
    $region29: #{tpu_custom_call.1} parent=1 // pred_fallthru
      _
    // Predicated region
    $region30: #{tpu_custom_call.1} parent=1 // pred_check
      _
    $region31: #{tpu_custom_call.1} parent=1 // pred_check_branch
      %58 = sbr.rel (0) target = $region33
    $region32: #{tpu_custom_call.1} parent=1 // pred_region
      %59 = dma.done [#allocation4], 128
    $region33: #{tpu_custom_call.1} parent=1 // pred_fallthru
      _
    // Predicated region
    $region34: #{tpu_custom_call.1} parent=1 // pred_check
      _
    $region35: #{tpu_custom_call.1} parent=1 // pred_check_branch
      %61 = sbr.rel (0) target = $region37
    $region36: #{tpu_custom_call.1} parent=1 // pred_region
      %62 = dma.done [#allocation6], 1024
    $region37: #{tpu_custom_call.1} parent=1 // pred_fallthru
      _
    // Predicated region
    $region38: #{tpu_custom_call.1} parent=1 // pred_check
      _
    $region39: #{tpu_custom_call.1} parent=1 // pred_check_branch
      %64 = sbr.rel (0) target = $region41
    $region40: #{tpu_custom_call.1} parent=1 // pred_region
      %65 = dma.done [#allocation6], 12288
    $region41: #{tpu_custom_call.1} parent=1 // pred_fallthru
      _
    %v67 = vld [vmem:[#allocation3] sm:$0xff]
    %v68 = vpack.c.bf16 %v67, %v67
    %v69 = vld [vmem:[#allocation5] sm:$0xff]
    %v70 = vld [vmem:[#allocation5 + $0x8] sm:$0xff]
    %v71 = vld [vmem:[#allocation5 + $0x10] sm:$0xff]
    %v72 = vld [vmem:[#allocation5 + $0x18] sm:$0xff]
    %v73 = vld [vmem:[#allocation5 + $0x20] sm:$0xff]
    %v74 = vld [vmem:[#allocation5 + $0x28] sm:$0xff]
    %v75 = vld [vmem:[#allocation5 + $0x30] sm:$0xff]
    %v76 = vld [vmem:[#allocation5 + $0x38] sm:$0xff]
    %v77 = vld [vmem:[%s2] sm:$0xf]
    %v79 = vlaneseq
    %v80 = vshrl.u32 %v79, 7
    %v81 = vsub.s32 0, %v80
    %v82 = vrot.slane %v77, %v81
    %v83 = vlaneseq
    %v84 = vshrl.u32 %v83, 7
    %v85 = vsub.s32 1, %v84
    %v86 = vrot.slane %v77, %v85
    %v87 = vlaneseq
    %v88 = vshrl.u32 %v87, 7
    %v89 = vsub.s32 2, %v88
    %v90 = vrot.slane %v77, %v89
    %v91 = vlaneseq
    %v92 = vshrl.u32 %v91, 7
    %v93 = vsub.s32 3, %v92
    %v94 = vrot.slane %v77, %v93
    %v107 = vunpack.c.l.b16 %v69
    %v108 = vunpack.c.h.b16 %v69
    %v109 = vunpack.c.l.b16 %v70
    %v110 = vunpack.c.h.b16 %v70
    %v111 = vunpack.c.l.b16 %v71
    %v112 = vunpack.c.h.b16 %v71
    %v113 = vunpack.c.l.b16 %v72
    %v114 = vunpack.c.h.b16 %v72
    %v115 = vunpack.c.l.b16 %v73
    %v116 = vunpack.c.h.b16 %v73
    %v117 = vunpack.c.l.b16 %v74
    %v118 = vunpack.c.h.b16 %v74
    %v119 = vunpack.c.l.b16 %v75
    %v120 = vunpack.c.h.b16 %v75
    %v121 = vunpack.c.l.b16 %v76
    %v122 = vunpack.c.h.b16 %v76
    %v123 = vpack.c.b16 %v111, %v107
    %v124 = vpack.c.b16 %v112, %v108
    %v125 = vpack.c.b16 %v113, %v109
    %v126 = vpack.c.b16 %v114, %v110
    %v127 = vpack.c.b16 %v119, %v115
    %v128 = vpack.c.b16 %v120, %v116
    %v129 = vpack.c.b16 %v121, %v117
    %v130 = vpack.c.b16 %v122, %v118
    %vm139 = vcmask 261120
    %v141 = vsel %vm139, %v68, 0
    %143 = vmatprep.subr.bf16.mxu0 0
    %144 = vmatpush1.bf16.msra.mxu0 0
    %145 = vmatprep.subr.bf16.mxu0 0
    %146 = vmatpush1.bf16.msra.mxu0 0
    %147 = vmatprep.subr.bf16.mxu0 0
    %148 = vmatpush1.bf16.msra.mxu0 0
    %149 = vmatprep.subr.bf16.mxu0 0
    %150 = vmatpush1.bf16.msra.mxu0 0
    %151 = vmatprep.subr.bf16.mxu0 0
    %152 = vmatpush1.bf16.msra.mxu0 0
    %153 = vmatprep.subr.bf16.mxu0 0
    %154 = vmatpush1.bf16.msra.mxu0 0
    %155 = vmatprep.subr.bf16.mxu0 %v128
    %156 = vmatpush1.bf16.msra.mxu0 %v127
    %157 = vmatprep.subr.bf16.mxu0 %v124
    %158 = vmatpush1.bf16.msra.mxu0 %v123
    %159 = vmatprep.subr.bf16.mxu0 0
    %160 = vmatpush2.bf16.msra.mxu0 0
    %161 = vmatprep.subr.bf16.mxu0 0
    %162 = vmatpush2.bf16.msra.mxu0 0
    %163 = vmatprep.subr.bf16.mxu0 0
    %164 = vmatpush2.bf16.msra.mxu0 0
    %165 = vmatprep.subr.bf16.mxu0 0
    %166 = vmatpush2.bf16.msra.mxu0 0
    %167 = vmatprep.subr.bf16.mxu0 0
    %168 = vmatpush2.bf16.msra.mxu0 0
    %169 = vmatprep.subr.bf16.mxu0 0
    %170 = vmatpush2.bf16.msra.mxu0 0
    %171 = vmatprep.subr.bf16.mxu0 0
    %172 = vmatpush2.bf16.msra.mxu0 0
    %173 = vmatprep.subr.bf16.mxu0 0
    %174 = vmatpush2.bf16.msra.mxu0 0
    %175 = vmatprep.mubr.bf16.mxu0 0
    %176 = vmatmul.mubr.bf16.gmra.mxu0 %v141
    %v177 = vpop.f32.mrf.mxu0
    %v178 = vadd.f32 %v82, %v177
    %v179 = vpop.f32.mrf.mxu0
    %v180 = vadd.f32 %v86, %v179
    %v181 = vpop.f32.mrf.mxu0
    %v182 = vpop.f32.mrf.mxu0
    %183 = vdwg.mxu0
    %184 = vmatprep.subr.bf16.mxu0 0
    %185 = vmatpush1.bf16.msra.mxu0 0
    %186 = vmatprep.subr.bf16.mxu0 0
    %187 = vmatpush1.bf16.msra.mxu0 0
    %188 = vmatprep.subr.bf16.mxu0 0
    %189 = vmatpush1.bf16.msra.mxu0 0
    %190 = vmatprep.subr.bf16.mxu0 0
    %191 = vmatpush1.bf16.msra.mxu0 0
    %192 = vmatprep.subr.bf16.mxu0 0
    %193 = vmatpush1.bf16.msra.mxu0 0
    %194 = vmatprep.subr.bf16.mxu0 0
    %195 = vmatpush1.bf16.msra.mxu0 0
    %196 = vmatprep.subr.bf16.mxu0 %v130
    %197 = vmatpush1.bf16.msra.mxu0 %v129
    %198 = vmatprep.subr.bf16.mxu0 %v126
    %199 = vmatpush1.bf16.msra.mxu0 %v125
    %200 = vmatprep.subr.bf16.mxu0 0
    %201 = vmatpush2.bf16.msra.mxu0 0
    %202 = vmatprep.subr.bf16.mxu0 0
    %203 = vmatpush2.bf16.msra.mxu0 0
    %204 = vmatprep.subr.bf16.mxu0 0
    %205 = vmatpush2.bf16.msra.mxu0 0
    %206 = vmatprep.subr.bf16.mxu0 0
    %207 = vmatpush2.bf16.msra.mxu0 0
    %208 = vmatprep.subr.bf16.mxu0 0
    %209 = vmatpush2.bf16.msra.mxu0 0
    %210 = vmatprep.subr.bf16.mxu0 0
    %211 = vmatpush2.bf16.msra.mxu0 0
    %212 = vmatprep.subr.bf16.mxu0 0
    %213 = vmatpush2.bf16.msra.mxu0 0
    %214 = vmatprep.subr.bf16.mxu0 0
    %215 = vmatpush2.bf16.msra.mxu0 0
    %216 = vmatprep.mubr.bf16.mxu0 0
    %217 = vmatmul.mubr.bf16.gmra.mxu0 %v141
    %v218 = vpop.f32.mrf.mxu0
    %v219 = vadd.f32 %v90, %v218
    %v220 = vpop.f32.mrf.mxu0
    %v221 = vadd.f32 %v94, %v220
    %v222 = vpop.f32.mrf.mxu0
    %v223 = vpop.f32.mrf.mxu0
    %224 = vdwg.mxu0
    %v225 = vmax.f32 %v178, 0.0
    %v226 = vmax.f32 %v180, 0.0
    %v227 = vmax.f32 %v219, 0.0
    %v228 = vmax.f32 %v221, 0.0
    %v229 = vpack.c.bf16 %v225, %v225
    %v230 = vpack.c.bf16 %v226, %v226
    %v231 = vpack.c.bf16 %v227, %v227
    %v232 = vpack.c.bf16 %v228, %v228
    %v233 = vld [vmem:[#allocation7] sm:$0xff]
    %v234 = vld [vmem:[#allocation7 + $0x8] sm:$0xf]
    %v235 = vld [vmem:[#allocation7 + $0xc] sm:$0xff]
    %v236 = vld [vmem:[#allocation7 + $0x14] sm:$0xf]
    %v237 = vld [vmem:[#allocation7 + $0x18] sm:$0xff]
    %v238 = vld [vmem:[#allocation7 + $0x20] sm:$0xf]
    %v239 = vld [vmem:[#allocation7 + $0x24] sm:$0xff]
    %v240 = vld [vmem:[#allocation7 + $0x2c] sm:$0xf]
    %v241 = vld [vmem:[#allocation7 + $0x30] sm:$0xff]
    %v242 = vld [vmem:[#allocation7 + $0x38] sm:$0xf]
    %v243 = vld [vmem:[#allocation7 + $0x3c] sm:$0xff]
    %v244 = vld [vmem:[#allocation7 + $0x44] sm:$0xf]
    %v245 = vld [vmem:[#allocation7 + $0x48] sm:$0xff]
    %v246 = vld [vmem:[#allocation7 + $0x50] sm:$0xf]
    %v247 = vld [vmem:[#allocation7 + $0x54] sm:$0xff]
    %v248 = vld [vmem:[#allocation7 + $0x5c] sm:$0xf]
    %v249 = vld [vmem:[#allocation7 + $0x60] sm:$0xff]
    %v250 = vld [vmem:[#allocation7 + $0x68] sm:$0xf]
    %v251 = vld [vmem:[#allocation7 + $0x6c] sm:$0xff]
    %v252 = vld [vmem:[#allocation7 + $0x74] sm:$0xf]
    %v253 = vld [vmem:[#allocation7 + $0x78] sm:$0xff]
    %v254 = vld [vmem:[#allocation7 + $0x80] sm:$0xf]
    %v255 = vld [vmem:[#allocation7 + $0x84] sm:$0xff]
    %v256 = vld [vmem:[#allocation7 + $0x8c] sm:$0xf]
    %v257 = vld [vmem:[#allocation7 + $0x90] sm:$0xff]
    %v258 = vld [vmem:[#allocation7 + $0x98] sm:$0xf]
    %v259 = vld [vmem:[#allocation7 + $0x9c] sm:$0xff]
    %v260 = vld [vmem:[#allocation7 + $0xa4] sm:$0xf]
    %v261 = vld [vmem:[#allocation7 + $0xa8] sm:$0xff]
    %v262 = vld [vmem:[#allocation7 + $0xb0] sm:$0xf]
    %v263 = vld [vmem:[#allocation7 + $0xb4] sm:$0xff]
    %v264 = vld [vmem:[#allocation7 + $0xbc] sm:$0xf]
    %v265 = vld [vmem:[#allocation7 + $0xc0] sm:$0xff]
    %v266 = vld [vmem:[#allocation7 + $0xc8] sm:$0xf]
    %v267 = vld [vmem:[#allocation7 + $0xcc] sm:$0xff]
    %v268 = vld [vmem:[#allocation7 + $0xd4] sm:$0xf]
    %v269 = vld [vmem:[#allocation7 + $0xd8] sm:$0xff]
    %v270 = vld [vmem:[#allocation7 + $0xe0] sm:$0xf]
    %v271 = vld [vmem:[#allocation7 + $0xe4] sm:$0xff]
    %v272 = vld [vmem:[#allocation7 + $0xec] sm:$0xf]
    %v273 = vld [vmem:[#allocation7 + $0xf0] sm:$0xff]
    %v274 = vld [vmem:[#allocation7 + $0xf8] sm:$0xf]
    %v275 = vld [vmem:[#allocation7 + $0xfc] sm:$0xff]
    %v276 = vld [vmem:[#allocation7 + $0x104] sm:$0xf]
    %v277 = vld [vmem:[#allocation7 + $0x108] sm:$0xff]
    %v278 = vld [vmem:[#allocation7 + $0x110] sm:$0xf]
    %v279 = vld [vmem:[#allocation7 + $0x114] sm:$0xff]
    %v280 = vld [vmem:[#allocation7 + $0x11c] sm:$0xf]
    %v281 = vld [vmem:[#allocation7 + $0x120] sm:$0xff]
    %v282 = vld [vmem:[#allocation7 + $0x128] sm:$0xf]
    %v283 = vld [vmem:[#allocation7 + $0x12c] sm:$0xff]
    %v284 = vld [vmem:[#allocation7 + $0x134] sm:$0xf]
    %v285 = vld [vmem:[#allocation7 + $0x138] sm:$0xff]
    %v286 = vld [vmem:[#allocation7 + $0x140] sm:$0xf]
    %v287 = vld [vmem:[#allocation7 + $0x144] sm:$0xff]
    %v288 = vld [vmem:[#allocation7 + $0x14c] sm:$0xf]
    %v289 = vld [vmem:[#allocation7 + $0x150] sm:$0xff]
    %v290 = vld [vmem:[#allocation7 + $0x158] sm:$0xf]
    %v291 = vld [vmem:[#allocation7 + $0x15c] sm:$0xff]
    %v292 = vld [vmem:[#allocation7 + $0x164] sm:$0xf]
    %v293 = vld [vmem:[#allocation7 + $0x168] sm:$0xff]
    %v294 = vld [vmem:[#allocation7 + $0x170] sm:$0xf]
    %v295 = vld [vmem:[#allocation7 + $0x174] sm:$0xff]
    %v296 = vld [vmem:[#allocation7 + $0x17c] sm:$0xf]
    %v297 = vld [vmem:[#allocation7 + $0x180] sm:$0xff]
    %v298 = vld [vmem:[#allocation7 + $0x188] sm:$0xf]
    %v299 = vld [vmem:[#allocation7 + $0x18c] sm:$0xff]
    %v300 = vld [vmem:[#allocation7 + $0x194] sm:$0xf]
    %v301 = vld [vmem:[#allocation7 + $0x198] sm:$0xff]
    %v302 = vld [vmem:[#allocation7 + $0x1a0] sm:$0xf]
    %v303 = vld [vmem:[#allocation7 + $0x1a4] sm:$0xff]
    %v304 = vld [vmem:[#allocation7 + $0x1ac] sm:$0xf]
    %v305 = vld [vmem:[#allocation7 + $0x1b0] sm:$0xff]
    %v306 = vld [vmem:[#allocation7 + $0x1b8] sm:$0xf]
    %v307 = vld [vmem:[#allocation7 + $0x1bc] sm:$0xff]
    %v308 = vld [vmem:[#allocation7 + $0x1c4] sm:$0xf]
    %v309 = vld [vmem:[#allocation7 + $0x1c8] sm:$0xff]
    %v310 = vld [vmem:[#allocation7 + $0x1d0] sm:$0xf]
    %v311 = vld [vmem:[#allocation7 + $0x1d4] sm:$0xff]
    %v312 = vld [vmem:[#allocation7 + $0x1dc] sm:$0xf]
    %v313 = vld [vmem:[#allocation7 + $0x1e0] sm:$0xff]
    %v314 = vld [vmem:[#allocation7 + $0x1e8] sm:$0xf]
    %v315 = vld [vmem:[#allocation7 + $0x1ec] sm:$0xff]
    %v316 = vld [vmem:[#allocation7 + $0x1f4] sm:$0xf]
    %v317 = vld [vmem:[#allocation7 + $0x1f8] sm:$0xff]
    %v318 = vld [vmem:[#allocation7 + $0x200] sm:$0xf]
    %v319 = vld [vmem:[#allocation7 + $0x204] sm:$0xff]
    %v320 = vld [vmem:[#allocation7 + $0x20c] sm:$0xf]
    %v321 = vld [vmem:[#allocation7 + $0x210] sm:$0xff]
    %v322 = vld [vmem:[#allocation7 + $0x218] sm:$0xf]
    %v323 = vld [vmem:[#allocation7 + $0x21c] sm:$0xff]
    %v324 = vld [vmem:[#allocation7 + $0x224] sm:$0xf]
    %v325 = vld [vmem:[#allocation7 + $0x228] sm:$0xff]
    %v326 = vld [vmem:[#allocation7 + $0x230] sm:$0xf]
    %v327 = vld [vmem:[#allocation7 + $0x234] sm:$0xff]
    %v328 = vld [vmem:[#allocation7 + $0x23c] sm:$0xf]
    %v329 = vld [vmem:[#allocation7 + $0x240] sm:$0xff]
    %v330 = vld [vmem:[#allocation7 + $0x248] sm:$0xf]
    %v331 = vld [vmem:[#allocation7 + $0x24c] sm:$0xff]
    %v332 = vld [vmem:[#allocation7 + $0x254] sm:$0xf]
    %v333 = vld [vmem:[#allocation7 + $0x258] sm:$0xff]
    %v334 = vld [vmem:[#allocation7 + $0x260] sm:$0xf]
    %v335 = vld [vmem:[#allocation7 + $0x264] sm:$0xff]
    %v336 = vld [vmem:[#allocation7 + $0x26c] sm:$0xf]
    %v337 = vld [vmem:[#allocation7 + $0x270] sm:$0xff]
    %v338 = vld [vmem:[#allocation7 + $0x278] sm:$0xf]
    %v339 = vld [vmem:[#allocation7 + $0x27c] sm:$0xff]
    %v340 = vld [vmem:[#allocation7 + $0x284] sm:$0xf]
    %v341 = vld [vmem:[#allocation7 + $0x288] sm:$0xff]
    %v342 = vld [vmem:[#allocation7 + $0x290] sm:$0xf]
    %v343 = vld [vmem:[#allocation7 + $0x294] sm:$0xff]
    %v344 = vld [vmem:[#allocation7 + $0x29c] sm:$0xf]
    %v345 = vld [vmem:[#allocation7 + $0x2a0] sm:$0xff]
    %v346 = vld [vmem:[#allocation7 + $0x2a8] sm:$0xf]
    %v347 = vld [vmem:[#allocation7 + $0x2ac] sm:$0xff]
    %v348 = vld [vmem:[#allocation7 + $0x2b4] sm:$0xf]
    %v349 = vld [vmem:[#allocation7 + $0x2b8] sm:$0xff]
    %v350 = vld [vmem:[#allocation7 + $0x2c0] sm:$0xf]
    %v351 = vld [vmem:[#allocation7 + $0x2c4] sm:$0xff]
    %v352 = vld [vmem:[#allocation7 + $0x2cc] sm:$0xf]
    %v353 = vld [vmem:[#allocation7 + $0x2d0] sm:$0xff]
    %v354 = vld [vmem:[#allocation7 + $0x2d8] sm:$0xf]
    %v355 = vld [vmem:[#allocation7 + $0x2dc] sm:$0xff]
    %v356 = vld [vmem:[#allocation7 + $0x2e4] sm:$0xf]
    %v357 = vld [vmem:[#allocation7 + $0x2e8] sm:$0xff]
    %v358 = vld [vmem:[#allocation7 + $0x2f0] sm:$0xf]
    %v359 = vld [vmem:[#allocation7 + $0x2f4] sm:$0xff]
    %v360 = vld [vmem:[#allocation7 + $0x2fc] sm:$0xf]
    %v361 = vld [vmem:[%s4] sm:$0x7]
    %v363 = vlaneseq
    %v364 = vshrl.u32 %v363, 7
    %v365 = vsub.s32 0, %v364
    %v366 = vrot.slane %v361, %v365
    %v367 = vlaneseq
    %v368 = vshrl.u32 %v367, 7
    %v369 = vsub.s32 1, %v368
    %v370 = vrot.slane %v361, %v369
    %v371 = vlaneseq
    %v372 = vshrl.u32 %v371, 7
    %v373 = vsub.s32 2, %v372
    %v374 = vrot.slane %v361, %v373
    %v506 = vunpack.c.l.b16 %v233
    %v507 = vunpack.c.h.b16 %v233
    %v508 = vunpack.c.l.b16 %v234
    %v509 = vunpack.c.l.b16 %v235
    %v510 = vunpack.c.h.b16 %v235
    %v511 = vunpack.c.l.b16 %v236
    %v512 = vunpack.c.l.b16 %v237
    %v513 = vunpack.c.h.b16 %v237
    %v514 = vunpack.c.l.b16 %v238
    %v515 = vunpack.c.l.b16 %v239
    %v516 = vunpack.c.h.b16 %v239
    %v517 = vunpack.c.l.b16 %v240
    %v518 = vunpack.c.l.b16 %v241
    %v519 = vunpack.c.h.b16 %v241
    %v520 = vunpack.c.l.b16 %v242
    %v521 = vunpack.c.l.b16 %v243
    %v522 = vunpack.c.h.b16 %v243
    %v523 = vunpack.c.l.b16 %v244
    %v524 = vunpack.c.l.b16 %v245
    %v525 = vunpack.c.h.b16 %v245
    %v526 = vunpack.c.l.b16 %v246
    %v527 = vunpack.c.l.b16 %v247
    %v528 = vunpack.c.h.b16 %v247
    %v529 = vunpack.c.l.b16 %v248
    %v530 = vunpack.c.l.b16 %v249
    %v531 = vunpack.c.h.b16 %v249
    %v532 = vunpack.c.l.b16 %v250
    %v533 = vunpack.c.l.b16 %v251
    %v534 = vunpack.c.h.b16 %v251
    %v535 = vunpack.c.l.b16 %v252
    %v536 = vunpack.c.l.b16 %v253
    %v537 = vunpack.c.h.b16 %v253
    %v538 = vunpack.c.l.b16 %v254
    %v539 = vunpack.c.l.b16 %v255
    %v540 = vunpack.c.h.b16 %v255
    %v541 = vunpack.c.l.b16 %v256
    %v542 = vunpack.c.l.b16 %v257
    %v543 = vunpack.c.h.b16 %v257
    %v544 = vunpack.c.l.b16 %v258
    %v545 = vunpack.c.l.b16 %v259
    %v546 = vunpack.c.h.b16 %v259
    %v547 = vunpack.c.l.b16 %v260
    %v548 = vunpack.c.l.b16 %v261
    %v549 = vunpack.c.h.b16 %v261
    %v550 = vunpack.c.l.b16 %v262
    %v551 = vunpack.c.l.b16 %v263
    %v552 = vunpack.c.h.b16 %v263
    %v553 = vunpack.c.l.b16 %v264
    %v554 = vunpack.c.l.b16 %v265
    %v555 = vunpack.c.h.b16 %v265
    %v556 = vunpack.c.l.b16 %v266
    %v557 = vunpack.c.l.b16 %v267
    %v558 = vunpack.c.h.b16 %v267
    %v559 = vunpack.c.l.b16 %v268
    %v560 = vunpack.c.l.b16 %v269
    %v561 = vunpack.c.h.b16 %v269
    %v562 = vunpack.c.l.b16 %v270
    %v563 = vunpack.c.l.b16 %v271
    %v564 = vunpack.c.h.b16 %v271
    %v565 = vunpack.c.l.b16 %v272
    %v566 = vunpack.c.l.b16 %v273
    %v567 = vunpack.c.h.b16 %v273
    %v568 = vunpack.c.l.b16 %v274
    %v569 = vunpack.c.l.b16 %v275
    %v570 = vunpack.c.h.b16 %v275
    %v571 = vunpack.c.l.b16 %v276
    %v572 = vunpack.c.l.b16 %v277
    %v573 = vunpack.c.h.b16 %v277
    %v574 = vunpack.c.l.b16 %v278
    %v575 = vunpack.c.l.b16 %v279
    %v576 = vunpack.c.h.b16 %v279
    %v577 = vunpack.c.l.b16 %v280
    %v578 = vunpack.c.l.b16 %v281
    %v579 = vunpack.c.h.b16 %v281
    %v580 = vunpack.c.l.b16 %v282
    %v581 = vunpack.c.l.b16 %v283
    %v582 = vunpack.c.h.b16 %v283
    %v583 = vunpack.c.l.b16 %v284
    %v584 = vunpack.c.l.b16 %v285
    %v585 = vunpack.c.h.b16 %v285
    %v586 = vunpack.c.l.b16 %v286
    %v587 = vunpack.c.l.b16 %v287
    %v588 = vunpack.c.h.b16 %v287
    %v589 = vunpack.c.l.b16 %v288
    %v590 = vunpack.c.l.b16 %v289
    %v591 = vunpack.c.h.b16 %v289
    %v592 = vunpack.c.l.b16 %v290
    %v593 = vunpack.c.l.b16 %v291
    %v594 = vunpack.c.h.b16 %v291
    %v595 = vunpack.c.l.b16 %v292
    %v596 = vunpack.c.l.b16 %v293
    %v597 = vunpack.c.h.b16 %v293
    %v598 = vunpack.c.l.b16 %v294
    %v599 = vunpack.c.l.b16 %v295
    %v600 = vunpack.c.h.b16 %v295
    %v601 = vunpack.c.l.b16 %v296
    %v602 = vunpack.c.l.b16 %v297
    %v603 = vunpack.c.h.b16 %v297
    %v604 = vunpack.c.l.b16 %v298
    %v605 = vunpack.c.l.b16 %v299
    %v606 = vunpack.c.h.b16 %v299
    %v607 = vunpack.c.l.b16 %v300
    %v608 = vunpack.c.l.b16 %v301
    %v609 = vunpack.c.h.b16 %v301
    %v610 = vunpack.c.l.b16 %v302
    %v611 = vunpack.c.l.b16 %v303
    %v612 = vunpack.c.h.b16 %v303
    %v613 = vunpack.c.l.b16 %v304
    %v614 = vunpack.c.l.b16 %v305
    %v615 = vunpack.c.h.b16 %v305
    %v616 = vunpack.c.l.b16 %v306
    %v617 = vunpack.c.l.b16 %v307
    %v618 = vunpack.c.h.b16 %v307
    %v619 = vunpack.c.l.b16 %v308
    %v620 = vunpack.c.l.b16 %v309
    %v621 = vunpack.c.h.b16 %v309
    %v622 = vunpack.c.l.b16 %v310
    %v623 = vunpack.c.l.b16 %v311
    %v624 = vunpack.c.h.b16 %v311
    %v625 = vunpack.c.l.b16 %v312
    %v626 = vunpack.c.l.b16 %v313
    %v627 = vunpack.c.h.b16 %v313
    %v628 = vunpack.c.l.b16 %v314
    %v629 = vunpack.c.l.b16 %v315
    %v630 = vunpack.c.h.b16 %v315
    %v631 = vunpack.c.l.b16 %v316
    %v632 = vunpack.c.l.b16 %v317
    %v633 = vunpack.c.h.b16 %v317
    %v634 = vunpack.c.l.b16 %v318
    %v635 = vunpack.c.l.b16 %v319
    %v636 = vunpack.c.h.b16 %v319
    %v637 = vunpack.c.l.b16 %v320
    %v638 = vunpack.c.l.b16 %v321
    %v639 = vunpack.c.h.b16 %v321
    %v640 = vunpack.c.l.b16 %v322
    %v641 = vunpack.c.l.b16 %v323
    %v642 = vunpack.c.h.b16 %v323
    %v643 = vunpack.c.l.b16 %v324
    %v644 = vunpack.c.l.b16 %v325
    %v645 = vunpack.c.h.b16 %v325
    %v646 = vunpack.c.l.b16 %v326
    %v647 = vunpack.c.l.b16 %v327
    %v648 = vunpack.c.h.b16 %v327
    %v649 = vunpack.c.l.b16 %v328
    %v650 = vunpack.c.l.b16 %v329
    %v651 = vunpack.c.h.b16 %v329
    %v652 = vunpack.c.l.b16 %v330
    %v653 = vunpack.c.l.b16 %v331
    %v654 = vunpack.c.h.b16 %v331
    %v655 = vunpack.c.l.b16 %v332
    %v656 = vunpack.c.l.b16 %v333
    %v657 = vunpack.c.h.b16 %v333
    %v658 = vunpack.c.l.b16 %v334
    %v659 = vunpack.c.l.b16 %v335
    %v660 = vunpack.c.h.b16 %v335
    %v661 = vunpack.c.l.b16 %v336
    %v662 = vunpack.c.l.b16 %v337
    %v663 = vunpack.c.h.b16 %v337
    %v664 = vunpack.c.l.b16 %v338
    %v665 = vunpack.c.l.b16 %v339
    %v666 = vunpack.c.h.b16 %v339
    %v667 = vunpack.c.l.b16 %v340
    %v668 = vunpack.c.l.b16 %v341
    %v669 = vunpack.c.h.b16 %v341
    %v670 = vunpack.c.l.b16 %v342
    %v671 = vunpack.c.l.b16 %v343
    %v672 = vunpack.c.h.b16 %v343
    %v673 = vunpack.c.l.b16 %v344
    %v674 = vunpack.c.l.b16 %v345
    %v675 = vunpack.c.h.b16 %v345
    %v676 = vunpack.c.l.b16 %v346
    %v677 = vunpack.c.l.b16 %v347
    %v678 = vunpack.c.h.b16 %v347
    %v679 = vunpack.c.l.b16 %v348
    %v680 = vunpack.c.l.b16 %v349
    %v681 = vunpack.c.h.b16 %v349
    %v682 = vunpack.c.l.b16 %v350
    %v683 = vunpack.c.l.b16 %v351
    %v684 = vunpack.c.h.b16 %v351
    %v685 = vunpack.c.l.b16 %v352
    %v686 = vunpack.c.l.b16 %v353
    %v687 = vunpack.c.h.b16 %v353
    %v688 = vunpack.c.l.b16 %v354
    %v689 = vunpack.c.l.b16 %v355
    %v690 = vunpack.c.h.b16 %v355
    %v691 = vunpack.c.l.b16 %v356
    %v692 = vunpack.c.l.b16 %v357
    %v693 = vunpack.c.h.b16 %v357
    %v694 = vunpack.c.l.b16 %v358
    %v695 = vunpack.c.l.b16 %v359
    %v696 = vunpack.c.h.b16 %v359
    %v697 = vunpack.c.l.b16 %v360
    %v698 = vpack.c.b16 %v509, %v506
    %v699 = vpack.c.b16 %v510, %v507
    %v700 = vpack.c.b16 %v511, %v508
    %v701 = vpack.c.b16 %v515, %v512
    %v702 = vpack.c.b16 %v516, %v513
    %v703 = vpack.c.b16 %v517, %v514
    %v704 = vpack.c.b16 %v521, %v518
    %v705 = vpack.c.b16 %v522, %v519
    %v706 = vpack.c.b16 %v523, %v520
    %v707 = vpack.c.b16 %v527, %v524
    %v708 = vpack.c.b16 %v528, %v525
    %v709 = vpack.c.b16 %v529, %v526
    %v710 = vpack.c.b16 %v533, %v530
    %v711 = vpack.c.b16 %v534, %v531
    %v712 = vpack.c.b16 %v535, %v532
    %v713 = vpack.c.b16 %v539, %v536
    %v714 = vpack.c.b16 %v540, %v537
    %v715 = vpack.c.b16 %v541, %v538
    %v716 = vpack.c.b16 %v545, %v542
    %v717 = vpack.c.b16 %v546, %v543
    %v718 = vpack.c.b16 %v547, %v544
    %v719 = vpack.c.b16 %v551, %v548
    %v720 = vpack.c.b16 %v552, %v549
    %v721 = vpack.c.b16 %v553, %v550
    %v722 = vpack.c.b16 %v557, %v554
    %v723 = vpack.c.b16 %v558, %v555
    %v724 = vpack.c.b16 %v559, %v556
    %v725 = vpack.c.b16 %v563, %v560
    %v726 = vpack.c.b16 %v564, %v561
    %v727 = vpack.c.b16 %v565, %v562
    %v728 = vpack.c.b16 %v569, %v566
    %v729 = vpack.c.b16 %v570, %v567
    %v730 = vpack.c.b16 %v571, %v568
    %v731 = vpack.c.b16 %v575, %v572
    %v732 = vpack.c.b16 %v576, %v573
    %v733 = vpack.c.b16 %v577, %v574
    %v734 = vpack.c.b16 %v581, %v578
    %v735 = vpack.c.b16 %v582, %v579
    %v736 = vpack.c.b16 %v583, %v580
    %v737 = vpack.c.b16 %v587, %v584
    %v738 = vpack.c.b16 %v588, %v585
    %v739 = vpack.c.b16 %v589, %v586
    %v740 = vpack.c.b16 %v593, %v590
    %v741 = vpack.c.b16 %v594, %v591
    %v742 = vpack.c.b16 %v595, %v592
    %v743 = vpack.c.b16 %v599, %v596
    %v744 = vpack.c.b16 %v600, %v597
    %v745 = vpack.c.b16 %v601, %v598
    %v746 = vpack.c.b16 %v605, %v602
    %v747 = vpack.c.b16 %v606, %v603
    %v748 = vpack.c.b16 %v607, %v604
    %v749 = vpack.c.b16 %v611, %v608
    %v750 = vpack.c.b16 %v612, %v609
    %v751 = vpack.c.b16 %v613, %v610
    %v752 = vpack.c.b16 %v617, %v614
    %v753 = vpack.c.b16 %v618, %v615
    %v754 = vpack.c.b16 %v619, %v616
    %v755 = vpack.c.b16 %v623, %v620
    %v756 = vpack.c.b16 %v624, %v621
    %v757 = vpack.c.b16 %v625, %v622
    %v758 = vpack.c.b16 %v629, %v626
    %v759 = vpack.c.b16 %v630, %v627
    %v760 = vpack.c.b16 %v631, %v628
    %v761 = vpack.c.b16 %v635, %v632
    %v762 = vpack.c.b16 %v636, %v633
    %v763 = vpack.c.b16 %v637, %v634
    %v764 = vpack.c.b16 %v641, %v638
    %v765 = vpack.c.b16 %v642, %v639
    %v766 = vpack.c.b16 %v643, %v640
    %v767 = vpack.c.b16 %v647, %v644
    %v768 = vpack.c.b16 %v648, %v645
    %v769 = vpack.c.b16 %v649, %v646
    %v770 = vpack.c.b16 %v653, %v650
    %v771 = vpack.c.b16 %v654, %v651
    %v772 = vpack.c.b16 %v655, %v652
    %v773 = vpack.c.b16 %v659, %v656
    %v774 = vpack.c.b16 %v660, %v657
    %v775 = vpack.c.b16 %v661, %v658
    %v776 = vpack.c.b16 %v665, %v662
    %v777 = vpack.c.b16 %v666, %v663
    %v778 = vpack.c.b16 %v667, %v664
    %v779 = vpack.c.b16 %v671, %v668
    %v780 = vpack.c.b16 %v672, %v669
    %v781 = vpack.c.b16 %v673, %v670
    %v782 = vpack.c.b16 %v677, %v674
    %v783 = vpack.c.b16 %v678, %v675
    %v784 = vpack.c.b16 %v679, %v676
    %v785 = vpack.c.b16 %v683, %v680
    %v786 = vpack.c.b16 %v684, %v681
    %v787 = vpack.c.b16 %v685, %v682
    %v788 = vpack.c.b16 %v689, %v686
    %v789 = vpack.c.b16 %v690, %v687
    %v790 = vpack.c.b16 %v691, %v688
    %v791 = vpack.c.b16 %v695, %v692
    %v792 = vpack.c.b16 %v696, %v693
    %v793 = vpack.c.b16 %v697, %v694
    %890 = vmatprep.subr.bf16.mxu0 %v720
    %891 = vmatpush1.bf16.msra.mxu0 %v719
    %892 = vmatprep.subr.bf16.mxu0 %v717
    %893 = vmatpush1.bf16.msra.mxu0 %v716
    %894 = vmatprep.subr.bf16.mxu0 %v714
    %895 = vmatpush1.bf16.msra.mxu0 %v713
    %896 = vmatprep.subr.bf16.mxu0 %v711
    %897 = vmatpush1.bf16.msra.mxu0 %v710
    %898 = vmatprep.subr.bf16.mxu0 %v708
    %899 = vmatpush1.bf16.msra.mxu0 %v707
    %900 = vmatprep.subr.bf16.mxu0 %v705
    %901 = vmatpush1.bf16.msra.mxu0 %v704
    %902 = vmatprep.subr.bf16.mxu0 %v702
    %903 = vmatpush1.bf16.msra.mxu0 %v701
    %904 = vmatprep.subr.bf16.mxu0 %v699
    %905 = vmatpush1.bf16.msra.mxu0 %v698
    %906 = vmatprep.subr.bf16.mxu0 %v744
    %907 = vmatpush2.bf16.msra.mxu0 %v743
    %908 = vmatprep.subr.bf16.mxu0 %v741
    %909 = vmatpush2.bf16.msra.mxu0 %v740
    %910 = vmatprep.subr.bf16.mxu0 %v738
    %911 = vmatpush2.bf16.msra.mxu0 %v737
    %912 = vmatprep.subr.bf16.mxu0 %v735
    %913 = vmatpush2.bf16.msra.mxu0 %v734
    %914 = vmatprep.subr.bf16.mxu0 %v732
    %915 = vmatpush2.bf16.msra.mxu0 %v731
    %916 = vmatprep.subr.bf16.mxu0 %v729
    %917 = vmatpush2.bf16.msra.mxu0 %v728
    %918 = vmatprep.subr.bf16.mxu0 %v726
    %919 = vmatpush2.bf16.msra.mxu0 %v725
    %920 = vmatprep.subr.bf16.mxu0 %v723
    %921 = vmatpush2.bf16.msra.mxu0 %v722
    %922 = vmatprep.mubr.bf16.mxu0 %v230
    %923 = vmatmul.mubr.bf16.gmra.mxu0 %v229
    %v924 = vpop.f32.mrf.mxu0
    %v925 = vadd.f32 %v366, %v924
    %v926 = vpop.f32.mrf.mxu0
    %v927 = vadd.f32 %v370, %v926
    %v928 = vpop.f32.mrf.mxu0
    %v929 = vpop.f32.mrf.mxu0
    %930 = vdwg.mxu0
    %931 = vmatprep.subr.bf16.mxu0 %v768
    %932 = vmatpush1.bf16.msra.mxu0 %v767
    %933 = vmatprep.subr.bf16.mxu0 %v765
    %934 = vmatpush1.bf16.msra.mxu0 %v764
    %935 = vmatprep.subr.bf16.mxu0 %v762
    %936 = vmatpush1.bf16.msra.mxu0 %v761
    %937 = vmatprep.subr.bf16.mxu0 %v759
    %938 = vmatpush1.bf16.msra.mxu0 %v758
    %939 = vmatprep.subr.bf16.mxu0 %v756
    %940 = vmatpush1.bf16.msra.mxu0 %v755
    %941 = vmatprep.subr.bf16.mxu0 %v753
    %942 = vmatpush1.bf16.msra.mxu0 %v752
    %943 = vmatprep.subr.bf16.mxu0 %v750
    %944 = vmatpush1.bf16.msra.mxu0 %v749
    %945 = vmatprep.subr.bf16.mxu0 %v747
    %946 = vmatpush1.bf16.msra.mxu0 %v746
    %947 = vmatprep.subr.bf16.mxu0 %v792
    %948 = vmatpush2.bf16.msra.mxu0 %v791
    %949 = vmatprep.subr.bf16.mxu0 %v789
    %950 = vmatpush2.bf16.msra.mxu0 %v788
    %951 = vmatprep.subr.bf16.mxu0 %v786
    %952 = vmatpush2.bf16.msra.mxu0 %v785
    %953 = vmatprep.subr.bf16.mxu0 %v783
    %954 = vmatpush2.bf16.msra.mxu0 %v782
    %955 = vmatprep.subr.bf16.mxu0 %v780
    %956 = vmatpush2.bf16.msra.mxu0 %v779
    %957 = vmatprep.subr.bf16.mxu0 %v777
    %958 = vmatpush2.bf16.msra.mxu0 %v776
    %959 = vmatprep.subr.bf16.mxu0 %v774
    %960 = vmatpush2.bf16.msra.mxu0 %v773
    %961 = vmatprep.subr.bf16.mxu0 %v771
    %962 = vmatpush2.bf16.msra.mxu0 %v770
    %963 = vmatprep.mubr.bf16.mxu0 %v232
    %964 = vmatmul.mubr.bf16.gmra.mxu0 %v231
    %v965 = vpop.f32.mrf.mxu0
    %v966 = vadd.f32 %v925, %v965
    %v967 = vpop.f32.mrf.mxu0
    %v968 = vadd.f32 %v927, %v967
    %v969 = vpop.f32.mrf.mxu0
    %v970 = vpop.f32.mrf.mxu0
    %971 = vdwg.mxu0
    %972 = vmatprep.subr.bf16.mxu0 0
    %973 = vmatpush1.bf16.msra.mxu0 %v721
    %974 = vmatprep.subr.bf16.mxu0 0
    %975 = vmatpush1.bf16.msra.mxu0 %v718
    %976 = vmatprep.subr.bf16.mxu0 0
    %977 = vmatpush1.bf16.msra.mxu0 %v715
    %978 = vmatprep.subr.bf16.mxu0 0
    %979 = vmatpush1.bf16.msra.mxu0 %v712
    %980 = vmatprep.subr.bf16.mxu0 0
    %981 = vmatpush1.bf16.msra.mxu0 %v709
    %982 = vmatprep.subr.bf16.mxu0 0
    %983 = vmatpush1.bf16.msra.mxu0 %v706
    %984 = vmatprep.subr.bf16.mxu0 0
    %985 = vmatpush1.bf16.msra.mxu0 %v703
    %986 = vmatprep.subr.bf16.mxu0 0
    %987 = vmatpush1.bf16.msra.mxu0 %v700
    %988 = vmatprep.subr.bf16.mxu0 0
    %989 = vmatpush2.bf16.msra.mxu0 %v745
    %990 = vmatprep.subr.bf16.mxu0 0
    %991 = vmatpush2.bf16.msra.mxu0 %v742
    %992 = vmatprep.subr.bf16.mxu0 0
    %993 = vmatpush2.bf16.msra.mxu0 %v739
    %994 = vmatprep.subr.bf16.mxu0 0
    %995 = vmatpush2.bf16.msra.mxu0 %v736
    %996 = vmatprep.subr.bf16.mxu0 0
    %997 = vmatpush2.bf16.msra.mxu0 %v733
    %998 = vmatprep.subr.bf16.mxu0 0
    %999 = vmatpush2.bf16.msra.mxu0 %v730
    %1000 = vmatprep.subr.bf16.mxu0 0
    %1001 = vmatpush2.bf16.msra.mxu0 %v727
    %1002 = vmatprep.subr.bf16.mxu0 0
    %1003 = vmatpush2.bf16.msra.mxu0 %v724
    %1004 = vmatprep.mubr.bf16.mxu0 %v230
    %1005 = vmatmul.mubr.bf16.gmra.mxu0 %v229
    %v1006 = vpop.f32.mrf.mxu0
    %v1007 = vadd.f32 %v374, %v1006
    %v1008 = vpop.f32.mrf.mxu0
    %v1009 = vpop.f32.mrf.mxu0
    %v1010 = vpop.f32.mrf.mxu0
    %1011 = vdwg.mxu0
    %1012 = vmatprep.subr.bf16.mxu0 0
    %1013 = vmatpush1.bf16.msra.mxu0 %v769
    %1014 = vmatprep.subr.bf16.mxu0 0
    %1015 = vmatpush1.bf16.msra.mxu0 %v766
    %1016 = vmatprep.subr.bf16.mxu0 0
    %1017 = vmatpush1.bf16.msra.mxu0 %v763
    %1018 = vmatprep.subr.bf16.mxu0 0
    %1019 = vmatpush1.bf16.msra.mxu0 %v760
    %1020 = vmatprep.subr.bf16.mxu0 0
    %1021 = vmatpush1.bf16.msra.mxu0 %v757
    %1022 = vmatprep.subr.bf16.mxu0 0
    %1023 = vmatpush1.bf16.msra.mxu0 %v754
    %1024 = vmatprep.subr.bf16.mxu0 0
    %1025 = vmatpush1.bf16.msra.mxu0 %v751
    %1026 = vmatprep.subr.bf16.mxu0 0
    %1027 = vmatpush1.bf16.msra.mxu0 %v748
    %1028 = vmatprep.subr.bf16.mxu0 0
    %1029 = vmatpush2.bf16.msra.mxu0 %v793
    %1030 = vmatprep.subr.bf16.mxu0 0
    %1031 = vmatpush2.bf16.msra.mxu0 %v790
    %1032 = vmatprep.subr.bf16.mxu0 0
    %1033 = vmatpush2.bf16.msra.mxu0 %v787
    %1034 = vmatprep.subr.bf16.mxu0 0
    %1035 = vmatpush2.bf16.msra.mxu0 %v784
    %1036 = vmatprep.subr.bf16.mxu0 0
    %1037 = vmatpush2.bf16.msra.mxu0 %v781
    %1038 = vmatprep.subr.bf16.mxu0 0
    %1039 = vmatpush2.bf16.msra.mxu0 %v778
    %1040 = vmatprep.subr.bf16.mxu0 0
    %1041 = vmatpush2.bf16.msra.mxu0 %v775
    %1042 = vmatprep.subr.bf16.mxu0 0
    %1043 = vmatpush2.bf16.msra.mxu0 %v772
    %1044 = vmatprep.mubr.bf16.mxu0 %v232
    %1045 = vmatmul.mubr.bf16.gmra.mxu0 %v231
    %v1046 = vpop.f32.mrf.mxu0
    %v1047 = vadd.f32 %v1007, %v1046
    %v1048 = vpop.f32.mrf.mxu0
    %v1049 = vpop.f32.mrf.mxu0
    %v1050 = vpop.f32.mrf.mxu0
    %1051 = vdwg.mxu0
    %v1052 = vmax.f32 %v966, 0.0
    %v1053 = vmax.f32 %v968, 0.0
    %v1054 = vmax.f32 %v1047, 0.0
    %v1055 = vld [vmem:[%s5] sm:$0x7]
    %v1056 = vunpack.c.l.bf16 %v1055
    %v1058 = vlaneseq
    %v1059 = vshrl.u32 %v1058, 7
    %v1060 = vsub.s32 0, %v1059
    %v1061 = vrot.slane %v1056, %v1060
    %v1062 = vlaneseq
    %v1063 = vshrl.u32 %v1062, 7
    %v1064 = vsub.s32 2, %v1063
    %v1065 = vrot.slane %v1056, %v1064
    %v1066 = vlaneseq
    %v1067 = vshrl.u32 %v1066, 7
    %v1068 = vsub.s32 4, %v1067
    %v1069 = vrot.slane %v1056, %v1068
    %v1073 = vlaneseq
    %v1074 = vshrl.u32 %v1073, 7
    %v1075 = vsub.s32 0, %v1074
    %v1076 = vrot.slane %v1061, %v1075
    %v1077 = vlaneseq
    %v1078 = vshrl.u32 %v1077, 7
    %v1079 = vsub.s32 0, %v1078
    %v1080 = vrot.slane %v1065, %v1079
    %v1081 = vlaneseq
    %v1082 = vshrl.u32 %v1081, 7
    %v1083 = vsub.s32 0, %v1082
    %v1084 = vrot.slane %v1069, %v1083
    %v1085 = vmul.f32 %v1052, %v1076
    %v1086 = vmul.f32 %v1053, %v1080
    %v1087 = vmul.f32 %v1054, %v1084
    %v1088 = vadd.f32 %v1085, %v1086
    %v1089 = vadd.f32 %v1088, %v1087
    %1090 = vadd.xlane.f32.xlu0 %v1089
    %v1091 = vpop.xlane.xlu0 %1090
    %s1092 = sld [smem:[#allocation2]]
    %v1093 = vstv %s1092
    %v1094 = vadd.f32 %v1091, %v1093
    %vm1095 = vcmask 7168
    %1096 = vst.msk [vmem:[%s7] sm:$0xff] %vm1095, %v1094
    // Predicated region
    $region42: #{tpu_custom_call.1} parent=1 // pred_check
      _
    $region43: #{tpu_custom_call.1} parent=1 // pred_check_branch
      %1098 = sbr.rel (0) target = $region45
    $region44: #{tpu_custom_call.1} parent=1 // pred_region
      _
    $region45: #{tpu_custom_call.1} parent=1 // pred_fallthru
      _
    // Predicated region
    $region46: #{tpu_custom_call.1} parent=1 // pred_check
      _
    $region47: #{tpu_custom_call.1} parent=1 // pred_check_branch
      %1100 = sbr.rel (0) target = $region49
    $region48: #{tpu_custom_call.1} parent=1 // pred_region
      _
    $region49: #{tpu_custom_call.1} parent=1 // pred_fallthru
      _
    %1101 = vsyncpa [#allocation4], 1
    %1102 = vsyncpa [#allocation6], 1

</llo_original>
